<compile_context>
chip_gen: v7x
topology: tpu7x:2x2x1
jax: 0.10.0
libtpu: 0.0.40
codegen_flags: <defaults>
</compile_context>

<pallas_src>
import functools
import numpy as np

import jax
import jax.numpy as jnp
from jax.experimental import pallas as pl
from jax.experimental.pallas import tpu as pltpu


_TILE_H_CAP = 1024   # sublane-dim source tile cap (multiple of 8)
_TILE_W_CAP = 512    # lane-dim source tile cap (multiple of 128)
_MEAN = (0.485, 0.456, 0.406)
_STD = (0.229, 0.224, 0.225)


# ----------------------------------------------------------------------------
# host-side helpers
# ----------------------------------------------------------------------------
def _cubic(x, a=-0.5):
    x = abs(float(x))
    if x <= 1.0:
        return (a + 2.0) * x ** 3 - (a + 3.0) * x ** 2 + 1.0
    if x < 2.0:
        return a * x ** 3 - 5.0 * a * x ** 2 + 8.0 * a * x - 4.0 * a
    return 0.0


def _bicubic_resize_matrix(in_size: int, out_size: int) -> np.ndarray:
    """Dense (out_size, in_size) antialiased bicubic interpolation matrix."""
    scale = in_size / out_size
    filterscale = max(scale, 1.0)          # antialias=True stretches the kernel
    support = 2.0 * filterscale
    w = np.zeros((out_size, in_size), dtype=np.float32)
    for i in range(out_size):
        center = (i + 0.5) * scale
        xmin = int(max(center - support + 0.5, 0))
        xmax = int(min(center + support + 0.5, in_size))
        vals = np.array(
            [_cubic((j - center + 0.5) / filterscale) for j in range(xmin, xmax)],
            dtype=np.float64,
        )
        vals /= vals.sum()
        w[i, xmin:xmax] = vals.astype(np.float32)
    return w


def _round_up(x: int, m: int) -> int:
    return -(-x // m) * m


def _band_decompose(w_os, tile0, n_tiles, n_slots, tile, out_pad, align):
    """Banded decomposition of a dense (out_pad, src_len) resize matrix.

    Returns (bands, offsets, band):
      bands:   (n_slots, band, tile) f32 — bands[t] are the `band` output rows
               of w_os that tile t can touch (zero-padded outside the matrix),
      offsets: (n_slots,) int32 output offsets, multiples of `align`,
      band:    static band extent, multiple of `align`, <= out_pad.
    Slots t >= n_tiles are exact zeros (padding for the 2-core split).
    """
    src_len = w_os.shape[1]
    subs, los, his = [], [], []
    for t in range(n_tiles):
        s0 = (tile0 + t) * tile
        sub = np.zeros((out_pad, tile), np.float32)
        v = max(0, min(tile, src_len - s0))
        if v > 0:
            sub[:, :v] = w_os[:, s0:s0 + v]
        subs.append(sub)
        nz = np.nonzero(np.any(sub != 0.0, axis=1))[0]
        if nz.size:
            los.append((int(nz[0]) // align) * align)
            his.append(int(nz[-1]) + 1)
        else:
            los.append(0)
            his.append(0)
    band = max([hi - lo for lo, hi in zip(los, his)] + [align])
    band = min(_round_up(band, align), out_pad)
    bands = np.zeros((n_slots, band, tile), np.float32)
    offs = np.zeros((n_slots,), np.int32)
    for t in range(n_tiles):
        off = min(los[t], out_pad - band)   # stays `align`-aligned
        offs[t] = off
        bands[t] = subs[t][off:off + band, :]
    return bands, offs, band


# ----------------------------------------------------------------------------
# Pallas kernels
# ----------------------------------------------------------------------------
def _resize_accum_kernel(roff_ref, coff_ref, img_ref, wv_ref, wh_ref, acc_ref, *,
                         n_wt_half, band_h, band_w, has_alpha, wv_first):
    ht = pl.program_id(1)
    wt = pl.program_id(2)
    wt_g = pl.program_id(0) * n_wt_half + wt      # global column-tile slot

    # Zero this core's private partial accumulator at its first grid step.
    @pl.when(jnp.logical_and(ht == 0, wt == 0))
    def _():
        acc_ref[...] = jnp.zeros_like(acc_ref)

    # Per-tile output offsets of the nonzero weight band (scalar-prefetched).
    row_off = pl.multiple_of(roff_ref[ht], 8)      # sublane-aligned
    col_off = pl.multiple_of(coff_ref[wt_g], 128)  # lane-aligned (unmasked vst)

    wv = wv_ref[ht]       # (band_h, th) bf16, resident in VMEM
    wh = wh_ref[wt_g]     # (tw, band_w) bf16, resident in VMEM

    if has_alpha:
        # AlphaComposite over an opaque background (single FMA per channel).
        # TODO(synk): the original AlphaComposite class is not shown; an opaque
        # white background is assumed here.
        a = img_ref[3].astype(jnp.float32) * (1.0 / 255.0)

    for ch in range(3):
        if has_alpha:
            x = img_ref[ch].astype(jnp.float32)
            comp = ((x - 255.0) * a + 255.0).astype(jnp.bfloat16)   # (th, tw)
        else:
            comp = img_ref[ch].astype(jnp.bfloat16)                  # exact
        if wv_first:
            tmp = jnp.dot(wv, comp, preferred_element_type=jnp.float32)
            part = jnp.dot(tmp.astype(jnp.bfloat16), wh,
                           preferred_element_type=jnp.float32)
        else:
            tmp = jnp.dot(comp, wh, preferred_element_type=jnp.float32)
            part = jnp.dot(wv, tmp.astype(jnp.bfloat16),
                           preferred_element_type=jnp.float32)
        # Accumulate into the aligned band of the resident output block.
        acc_ref[0, ch, pl.ds(row_off, band_h), pl.ds(col_off, band_w)] += part


def _finalize_kernel(acc_ref, out_ref, *, scale, bias, crop):
    # acc_ref: (2, 3, rows_pad, cols_pad) f32 partials; out_ref: (3, crop, crop).
    for ch in range(3):
        s = acc_ref[0, ch] + acc_ref[1, ch]
        # Resize runs on a uint8 tensor in the torch pipeline: round & clamp.
        # (round-half-away-from-zero; torch's ties-to-even can differ by 1 LSB)
        q = jnp.clip(jnp.floor(s + 0.5), 0.0, 255.0)
        # ToDtype(scale=True) + Normalize folded into one FMA, then lane-crop.
        out_ref[ch] = (q * scale[ch] + bias[ch])[:crop, :crop]


# ----------------------------------------------------------------------------
# wrapper
# ----------------------------------------------------------------------------
def dinov2_preprocess(img_u8: jax.Array, resize_size: int = 256, crop_size: int = 224):
    """img_u8: (3|4, H, W) uint8 CHW image.  Returns (1, 3, crop, crop) f32."""
    c_in, h_in, w_in = img_u8.shape
    assert c_in in (3, 4), "expects an RGB or RGBA CHW image"
    assert img_u8.dtype == jnp.uint8, "pass the raw uint8 image (cast happens on-chip)"
    assert resize_size >= crop_size
    has_alpha = (c_in == 4)

    # torchvision Resize(size): smaller edge -> size, keep aspect ratio.
    if h_in <= w_in:
        new_h, new_w = resize_size, int(resize_size * w_in / h_in)
    else:
        new_h, new_w = int(resize_size * h_in / w_in), resize_size

    # torchvision CenterCrop offsets, folded directly into the resize matrices.
    crop_top = int(round((new_h - crop_size) / 2.0))
    crop_left = int(round((new_w - crop_size) / 2.0))

    # Output accumulator padding: sublanes to x8, lanes to x128 (224 -> 256) so
    # every accumulator store is unmasked and lane-dense.
    rows_pad = _round_up(crop_size, 8)
    cols_pad = _round_up(crop_size, 128)

    # Dense (out, src) cropped resize matrices, zero-padded along the out dim.
    wv_os = np.zeros((rows_pad, h_in), np.float32)
    wv_os[:crop_size] = _bicubic_resize_matrix(h_in, new_h)[crop_top:crop_top + crop_size]
    wh_os = np.zeros((cols_pad, w_in), np.float32)
    wh_os[:crop_size] = _bicubic_resize_matrix(w_in, new_w)[crop_left:crop_left + crop_size]

    # Tile sizes: full dim when small, otherwise (8,128)-aligned caps.
    th = h_in if h_in <= _TILE_H_CAP else _TILE_H_CAP
    tw = w_in if w_in <= _TILE_W_CAP else _TILE_W_CAP

    # Trim the grid to source tiles inside the bicubic support of the crop.
    h_nz = np.nonzero(np.any(wv_os != 0.0, axis=0))[0]
    w_nz = np.nonzero(np.any(wh_os != 0.0, axis=0))[0]
    ht0, ht1 = int(h_nz[0]) // th, -(-(int(h_nz[-1]) + 1) // th)
    wt0, wt1 = int(w_nz[0]) // tw, -(-(int(w_nz[-1]) + 1) // tw)
    n_ht, n_wt = ht1 - ht0, wt1 - wt0

    # The column-tile contraction is split across a leading size-2 "parallel"
    # grid axis (both v7x TensorCores); pad the slot count to an even number.
    n_wt_half = -(-n_wt // 2)
    n_wt_pad = 2 * n_wt_half

    # Banded weights + per-tile output offsets (rows outside a tile's support
    # are exact zeros, so banding is lossless).
    wv_band, row_off, band_h = _band_decompose(wv_os, ht0, n_ht, n_ht, th, rows_pad, 8)
    wh_band_oc, col_off, band_w = _band_decompose(wh_os, wt0, n_wt, n_wt_pad, tw, cols_pad, 128)
    wh_band = np.ascontiguousarray(np.transpose(wh_band_oc, (0, 2, 1)))  # (slots, tw, band_w)

    # Matmul order: minimize total MACs given the banded output dims.
    wv_first = band_h * tw * (th + band_w) <= th * band_w * (tw + band_h)

    # ToDtype(scale=True) + Normalize folded into one FMA per channel.
    scale = tuple(1.0 / (255.0 * s) for s in _STD)
    bias = tuple(-m / s for m, s in zip(_MEAN, _STD))

    w_blk_max = -(-w_in // tw) - 1   # clamp target for zero-weight pad slots

    kernel = functools.partial(
        _resize_accum_kernel, n_wt_half=n_wt_half, band_h=band_h, band_w=band_w,
        has_alpha=has_alpha, wv_first=wv_first)

    partials = pl.pallas_call(
        kernel,
        out_shape=jax.ShapeDtypeStruct((2, 3, rows_pad, cols_pad), jnp.float32),
        grid_spec=pltpu.PrefetchScalarGridSpec(
            num_scalar_prefetch=2,                 # row_off, col_off -> SMEM
            grid=(2, n_ht, n_wt_half),
            in_specs=[
                # uint8 image tile (all channels -> alpha DMA'd once per tile).
                pl.BlockSpec(
                    (c_in, th, tw),
                    lambda c, i, j, roff, coff: (
                        0, i + ht0,
                        jnp.minimum(wt0 + c * n_wt_half + j, w_blk_max))),
                # Banded resize weights: resident in VMEM (DMA'd once, constant
                # index_map), sliced per tile inside the kernel.
                pl.BlockSpec((n_ht, band_h, th),
                             lambda c, i, j, roff, coff: (0, 0, 0)),
                pl.BlockSpec((n_wt_pad, tw, band_w),
                             lambda c, i, j, roff, coff: (0, 0, 0)),
            ],
            # Per-core resident partial accumulator, single HBM writeback.
            out_specs=pl.BlockSpec((1, 3, rows_pad, cols_pad),
                                   lambda c, i, j, roff, coff: (c, 0, 0, 0)),
        ),
        compiler_params=pltpu.CompilerParams(
            dimension_semantics=("parallel", "arbitrary", "arbitrary"),
            # <= ~48 MiB: fits the 64 MiB/TC v7x budget, plenty on v5e/v6e.
            vmem_limit_bytes=48 * 1024 * 1024,
        ),
    )(
        jnp.asarray(row_off), jnp.asarray(col_off),
        img_u8,
        jnp.asarray(wv_band, dtype=jnp.bfloat16),
        jnp.asarray(wh_band, dtype=jnp.bfloat16),
    )

    # Combine the two cores' partial sums, round/clamp to the uint8 domain,
    # apply the folded scale+Normalize FMA and drop the lane padding.
    out = pl.pallas_call(
        functools.partial(_finalize_kernel, scale=scale, bias=bias, crop=crop_size),
        out_shape=jax.ShapeDtypeStruct((3, crop_size, crop_size), jnp.float32),
    )(partials)

    return out[None]  # unsqueeze(0) -> (1, 3, crop, crop)


if __name__ == "__main__":
    # Small analog of the real pipeline (32x32 RGBA -> resize 16 -> crop 8).
    key = jax.random.PRNGKey(0)
    rgba = jax.random.randint(key, (4, 32, 32), 0, 256, dtype=jnp.int32).astype(jnp.uint8)

    # TODO(synk): PIL image decoding / mode conversion (Image.open, .convert('RGB'))
    # has no Pallas equivalent; the input is the already-decoded uint8 CHW tensor.
    out = dinov2_preprocess(rgba, resize_size=16, crop_size=8)
    out = jax.block_until_ready(out)

    assert out.shape == (1, 3, 8, 8) and out.dtype == jnp.float32
    assert bool(jnp.all(jnp.isfinite(out)))
    print("KERNEL_OK")
</pallas_src>

<mosaic_0001>
module attributes {stable_mosaic.version = 11 : i64} {
  func.func @_resize_accum_kernel(%arg0: i32, %arg1: i32, %arg2: i32, %arg3: memref<1xi32, #tpu.memory_space<smem>>, %arg4: memref<2xi32, #tpu.memory_space<smem>>, %arg5: memref<4x32x32xi8, #tpu.memory_space<vmem>>, %arg6: memref<1x8x32xbf16, #tpu.memory_space<vmem>>, %arg7: memref<2x32x128xbf16, #tpu.memory_space<vmem>>, %arg8: memref<1x3x8x128xf32, #tpu.memory_space<vmem>>) attributes {dimension_semantics = [#tpu.dimension_semantics<parallel>, #tpu.dimension_semantics<arbitrary>, #tpu.dimension_semantics<arbitrary>], iteration_bounds = array<i64: 2, 1, 1>, scalar_prefetch = 2 : i64, scratch_operands = 0 : i64, tpu.core_type = #tpu.core_type<tc>, window_params = [{transform_indices = @transform_0, window_bounds = array<i64: 4, 32, 32>}, {pipeline_mode = #tpu.pipeline_mode<synchronous>, transform_indices = @transform_1, window_bounds = array<i64: 1, 8, 32>}, {pipeline_mode = #tpu.pipeline_mode<synchronous>, transform_indices = @transform_2, window_bounds = array<i64: 2, 32, 128>}, {transform_indices = @transform_3, window_bounds = array<i64: 1, 3, 8, 128>}]} {
    %c1_i32 = arith.constant 1 : i32
    %0 = arith.muli %arg0, %c1_i32 : i32
    %1 = arith.addi %0, %arg2 : i32
    %c0_i32 = arith.constant 0 : i32
    %2 = arith.cmpi eq, %arg1, %c0_i32 : i32
    %c0_i32_0 = arith.constant 0 : i32
    %3 = arith.cmpi eq, %arg2, %c0_i32_0 : i32
    %4 = arith.andi %2, %3 : i1
    %5 = arith.extui %4 : i1 to i32
    %c0_i32_1 = arith.constant 0 : i32
    %6 = arith.cmpi ne, %5, %c0_i32_1 : i32
    scf.if %6 {
      %cst_38 = arith.constant 0.000000e+00 : f32
      %90 = vector.broadcast %cst_38 : f32 to vector<1x3x8x128xf32>
      %c0_39 = arith.constant 0 : index
      %c0_40 = arith.constant 0 : index
      %c0_41 = arith.constant 0 : index
      %c0_42 = arith.constant 0 : index
      %91 = vector.load %arg8[%c0_39, %c0_40, %c0_41, %c0_42] : memref<1x3x8x128xf32, #tpu.memory_space<vmem>>, vector<1x3x8x128xf32>
      tpu.vector_store %arg8[%c0_39, %c0_40, %c0_41, %c0_42], %90 {strides = array<i32>} : memref<1x3x8x128xf32, #tpu.memory_space<vmem>>, vector<1x3x8x128xf32>,
    } else {
    }
    %7 = arith.index_cast %arg1 : i32 to index
    %8 = memref.load %arg3[%7] : memref<1xi32, #tpu.memory_space<smem>>
    %9 = tpu.assume_multiple %8, 8 : i32
    %10 = arith.index_cast %1 : i32 to index
    %11 = memref.load %arg4[%10] : memref<2xi32, #tpu.memory_space<smem>>
    %12 = tpu.assume_multiple %11, 128 : i32
    %13 = arith.index_cast %arg1 : i32 to index
    %c0 = arith.constant 0 : index
    %c0_2 = arith.constant 0 : index
    %14 = vector.load %arg6[%13, %c0, %c0_2] : memref<1x8x32xbf16, #tpu.memory_space<vmem>>, vector<1x8x32xbf16>
    %15 = vector.shape_cast %14 : vector<1x8x32xbf16> to vector<8x32xbf16>
    %16 = arith.index_cast %1 : i32 to index
    %c0_3 = arith.constant 0 : index
    %c0_4 = arith.constant 0 : index
    %17 = vector.load %arg7[%16, %c0_3, %c0_4] : memref<2x32x128xbf16, #tpu.memory_space<vmem>>, vector<1x32x128xbf16>
    %18 = vector.shape_cast %17 : vector<1x32x128xbf16> to vector<32x128xbf16>
    %c3 = arith.constant 3 : index
    %c0_5 = arith.constant 0 : index
    %c0_6 = arith.constant 0 : index
    %19 = vector.load %arg5[%c3, %c0_5, %c0_6] : memref<4x32x32xi8, #tpu.memory_space<vmem>>, vector<1x32x32xi8>
    %20 = vector.shape_cast %19 : vector<1x32x32xi8> to vector<32x32xi8>
    %21 = arith.uitofp %20 : vector<32x32xi8> to vector<32x32xf32>
    %cst = arith.constant 0.00392156886 : f32
    %22 = vector.broadcast %cst : f32 to vector<32x32xf32>
    %23 = arith.mulf %21, %22 : vector<32x32xf32>
    %c0_7 = arith.constant 0 : index
    %c0_8 = arith.constant 0 : index
    %c0_9 = arith.constant 0 : index
    %24 = vector.load %arg5[%c0_7, %c0_8, %c0_9] : memref<4x32x32xi8, #tpu.memory_space<vmem>>, vector<1x32x32xi8>
    %25 = vector.shape_cast %24 : vector<1x32x32xi8> to vector<32x32xi8>
    %26 = arith.uitofp %25 : vector<32x32xi8> to vector<32x32xf32>
    %cst_10 = arith.constant 2.550000e+02 : f32
    %27 = vector.broadcast %cst_10 : f32 to vector<32x32xf32>
    %28 = arith.subf %26, %27 : vector<32x32xf32>
    %29 = arith.mulf %28, %23 : vector<32x32xf32>
    %cst_11 = arith.constant 2.550000e+02 : f32
    %30 = vector.broadcast %cst_11 : f32 to vector<32x32xf32>
    %31 = arith.addf %29, %30 : vector<32x32xf32>
    %32 = arith.truncf %31 : vector<32x32xf32> to vector<32x32xbf16>
    %cst_12 = arith.constant dense<0.000000e+00> : vector<8x32xf32>
    %33 = tpu.matmul %15, %32, %cst_12 {dimension_numbers = #tpu.dot_dimension_numbers<[1], [0], [0], [1], [0, 0, 1, 1], [], []>} : vector<8x32xbf16>, vector<32x32xbf16>, vector<8x32xf32> -> vector<8x32xf32>
    %34 = arith.truncf %33 : vector<8x32xf32> to vector<8x32xbf16>
    %cst_13 = arith.constant dense<0.000000e+00> : vector<8x128xf32>
    %35 = tpu.matmul %34, %18, %cst_13 {dimension_numbers = #tpu.dot_dimension_numbers<[1], [0], [0], [1], [0, 0, 1, 1], [], []>} : vector<8x32xbf16>, vector<32x128xbf16>, vector<8x128xf32> -> vector<8x128xf32>
    %c0_14 = arith.constant 0 : index
    %c0_15 = arith.constant 0 : index
    %36 = arith.index_cast %9 : i32 to index
    %37 = arith.index_cast %12 : i32 to index
    %38 = vector.load %arg8[%c0_14, %c0_15, %36, %37] : memref<1x3x8x128xf32, #tpu.memory_space<vmem>>, vector<1x1x8x128xf32>
    %39 = vector.shape_cast %38 : vector<1x1x8x128xf32> to vector<8x128xf32>
    %40 = arith.addf %39, %35 : vector<8x128xf32>
    %c0_16 = arith.constant 0 : index
    %c0_17 = arith.constant 0 : index
    %41 = arith.index_cast %9 : i32 to index
    %42 = arith.index_cast %12 : i32 to index
    %43 = vector.load %arg8[%c0_16, %c0_17, %41, %42] : memref<1x3x8x128xf32, #tpu.memory_space<vmem>>, vector<1x1x8x128xf32>
    %44 = vector.shape_cast %43 : vector<1x1x8x128xf32> to vector<8x128xf32>
    %45 = vector.shape_cast %40 : vector<8x128xf32> to vector<1x1x8x128xf32>
    tpu.vector_store %arg8[%c0_16, %c0_17, %41, %42], %45 {strides = array<i32>} : memref<1x3x8x128xf32, #tpu.memory_space<vmem>>, vector<1x1x8x128xf32>,
    %c1 = arith.constant 1 : index
    %c0_18 = arith.constant 0 : index
    %c0_19 = arith.constant 0 : index
    %46 = vector.load %arg5[%c1, %c0_18, %c0_19] : memref<4x32x32xi8, #tpu.memory_space<vmem>>, vector<1x32x32xi8>
    %47 = vector.shape_cast %46 : vector<1x32x32xi8> to vector<32x32xi8>
    %48 = arith.uitofp %47 : vector<32x32xi8> to vector<32x32xf32>
    %cst_20 = arith.constant 2.550000e+02 : f32
    %49 = vector.broadcast %cst_20 : f32 to vector<32x32xf32>
    %50 = arith.subf %48, %49 : vector<32x32xf32>
    %51 = arith.mulf %50, %23 : vector<32x32xf32>
    %cst_21 = arith.constant 2.550000e+02 : f32
    %52 = vector.broadcast %cst_21 : f32 to vector<32x32xf32>
    %53 = arith.addf %51, %52 : vector<32x32xf32>
    %54 = arith.truncf %53 : vector<32x32xf32> to vector<32x32xbf16>
    %cst_22 = arith.constant dense<0.000000e+00> : vector<8x32xf32>
    %55 = tpu.matmul %15, %54, %cst_22 {dimension_numbers = #tpu.dot_dimension_numbers<[1], [0], [0], [1], [0, 0, 1, 1], [], []>} : vector<8x32xbf16>, vector<32x32xbf16>, vector<8x32xf32> -> vector<8x32xf32>
    %56 = arith.truncf %55 : vector<8x32xf32> to vector<8x32xbf16>
    %cst_23 = arith.constant dense<0.000000e+00> : vector<8x128xf32>
    %57 = tpu.matmul %56, %18, %cst_23 {dimension_numbers = #tpu.dot_dimension_numbers<[1], [0], [0], [1], [0, 0, 1, 1], [], []>} : vector<8x32xbf16>, vector<32x128xbf16>, vector<8x128xf32> -> vector<8x128xf32>
    %c0_24 = arith.constant 0 : index
    %c1_25 = arith.constant 1 : index
    %58 = arith.index_cast %9 : i32 to index
    %59 = arith.index_cast %12 : i32 to index
    %60 = vector.load %arg8[%c0_24, %c1_25, %58, %59] : memref<1x3x8x128xf32, #tpu.memory_space<vmem>>, vector<1x1x8x128xf32>
    %61 = vector.shape_cast %60 : vector<1x1x8x128xf32> to vector<8x128xf32>
    %62 = arith.addf %61, %57 : vector<8x128xf32>
    %c0_26 = arith.constant 0 : index
    %c1_27 = arith.constant 1 : index
    %63 = arith.index_cast %9 : i32 to index
    %64 = arith.index_cast %12 : i32 to index
    %65 = vector.load %arg8[%c0_26, %c1_27, %63, %64] : memref<1x3x8x128xf32, #tpu.memory_space<vmem>>, vector<1x1x8x128xf32>
    %66 = vector.shape_cast %65 : vector<1x1x8x128xf32> to vector<8x128xf32>
    %67 = vector.shape_cast %62 : vector<8x128xf32> to vector<1x1x8x128xf32>
    tpu.vector_store %arg8[%c0_26, %c1_27, %63, %64], %67 {strides = array<i32>} : memref<1x3x8x128xf32, #tpu.memory_space<vmem>>, vector<1x1x8x128xf32>,
    %c2 = arith.constant 2 : index
    %c0_28 = arith.constant 0 : index
    %c0_29 = arith.constant 0 : index
    %68 = vector.load %arg5[%c2, %c0_28, %c0_29] : memref<4x32x32xi8, #tpu.memory_space<vmem>>, vector<1x32x32xi8>
    %69 = vector.shape_cast %68 : vector<1x32x32xi8> to vector<32x32xi8>
    %70 = arith.uitofp %69 : vector<32x32xi8> to vector<32x32xf32>
    %cst_30 = arith.constant 2.550000e+02 : f32
    %71 = vector.broadcast %cst_30 : f32 to vector<32x32xf32>
    %72 = arith.subf %70, %71 : vector<32x32xf32>
    %73 = arith.mulf %72, %23 : vector<32x32xf32>
    %cst_31 = arith.constant 2.550000e+02 : f32
    %74 = vector.broadcast %cst_31 : f32 to vector<32x32xf32>
    %75 = arith.addf %73, %74 : vector<32x32xf32>
    %76 = arith.truncf %75 : vector<32x32xf32> to vector<32x32xbf16>
    %cst_32 = arith.constant dense<0.000000e+00> : vector<8x32xf32>
    %77 = tpu.matmul %15, %76, %cst_32 {dimension_numbers = #tpu.dot_dimension_numbers<[1], [0], [0], [1], [0, 0, 1, 1], [], []>} : vector<8x32xbf16>, vector<32x32xbf16>, vector<8x32xf32> -> vector<8x32xf32>
    %78 = arith.truncf %77 : vector<8x32xf32> to vector<8x32xbf16>
    %cst_33 = arith.constant dense<0.000000e+00> : vector<8x128xf32>
    %79 = tpu.matmul %78, %18, %cst_33 {dimension_numbers = #tpu.dot_dimension_numbers<[1], [0], [0], [1], [0, 0, 1, 1], [], []>} : vector<8x32xbf16>, vector<32x128xbf16>, vector<8x128xf32> -> vector<8x128xf32>
    %c0_34 = arith.constant 0 : index
    %c2_35 = arith.constant 2 : index
    %80 = arith.index_cast %9 : i32 to index
    %81 = arith.index_cast %12 : i32 to index
    %82 = vector.load %arg8[%c0_34, %c2_35, %80, %81] : memref<1x3x8x128xf32, #tpu.memory_space<vmem>>, vector<1x1x8x128xf32>
    %83 = vector.shape_cast %82 : vector<1x1x8x128xf32> to vector<8x128xf32>
    %84 = arith.addf %83, %79 : vector<8x128xf32>
    %c0_36 = arith.constant 0 : index
    %c2_37 = arith.constant 2 : index
    %85 = arith.index_cast %9 : i32 to index
    %86 = arith.index_cast %12 : i32 to index
    %87 = vector.load %arg8[%c0_36, %c2_37, %85, %86] : memref<1x3x8x128xf32, #tpu.memory_space<vmem>>, vector<1x1x8x128xf32>
    %88 = vector.shape_cast %87 : vector<1x1x8x128xf32> to vector<8x128xf32>
    %89 = vector.shape_cast %84 : vector<8x128xf32> to vector<1x1x8x128xf32>
    tpu.vector_store %arg8[%c0_36, %c2_37, %85, %86], %89 {strides = array<i32>} : memref<1x3x8x128xf32, #tpu.memory_space<vmem>>, vector<1x1x8x128xf32>,
    return
  }
  func.func @transform_0(%arg0: i32, %arg1: i32, %arg2: i32, %arg3: memref<1xi32, #tpu.memory_space<smem>>, %arg4: memref<2xi32, #tpu.memory_space<smem>>) -> (i32, i32, i32) {
    %c0_i32 = arith.constant 0 : i32
    %0 = arith.addi %arg1, %c0_i32 : i32
    %c1_i32 = arith.constant 1 : i32
    %1 = arith.muli %arg0, %c1_i32 : i32
    %c0_i32_0 = arith.constant 0 : i32
    %2 = arith.addi %c0_i32_0, %1 : i32
    %3 = arith.addi %2, %arg2 : i32
    %c0_i32_1 = arith.constant 0 : i32
    %4 = arith.minsi %3, %c0_i32_1 : i32
    %c0_i32_2 = arith.constant 0 : i32
    %c0_i32_3 = arith.constant 0 : i32
    return %c0_i32_2, %0, %4 : i32, i32, i32
  }
  func.func @transform_1(%arg0: i32, %arg1: i32, %arg2: i32, %arg3: memref<1xi32, #tpu.memory_space<smem>>, %arg4: memref<2xi32, #tpu.memory_space<smem>>) -> (i32, i32, i32) {
    %c0_i32 = arith.constant 0 : i32
    %c0_i32_0 = arith.constant 0 : i32
    %c0_i32_1 = arith.constant 0 : i32
    %c0_i32_2 = arith.constant 0 : i32
    return %c0_i32, %c0_i32_0, %c0_i32_1 : i32, i32, i32
  }
  func.func @transform_2(%arg0: i32, %arg1: i32, %arg2: i32, %arg3: memref<1xi32, #tpu.memory_space<smem>>, %arg4: memref<2xi32, #tpu.memory_space<smem>>) -> (i32, i32, i32) {
    %c0_i32 = arith.constant 0 : i32
    %c0_i32_0 = arith.constant 0 : i32
    %c0_i32_1 = arith.constant 0 : i32
    %c0_i32_2 = arith.constant 0 : i32
    return %c0_i32, %c0_i32_0, %c0_i32_1 : i32, i32, i32
  }
  func.func @transform_3(%arg0: i32, %arg1: i32, %arg2: i32, %arg3: memref<1xi32, #tpu.memory_space<smem>>, %arg4: memref<2xi32, #tpu.memory_space<smem>>) -> (i32, i32, i32, i32) {
    %c0_i32 = arith.constant 0 : i32
    %c0_i32_0 = arith.constant 0 : i32
    %c0_i32_1 = arith.constant 0 : i32
    %c0_i32_2 = arith.constant 0 : i32
    return %arg0, %c0_i32, %c0_i32_0, %c0_i32_1 : i32, i32, i32, i32
  }
}

</mosaic_0001>

<llo_original>
// kernel: tpu_custom_call.1
$region0: #{tpu_custom_call.1}
  #allocation0 [shape = 'u32[]', space=smem, size = 0x4, offset = 0x4, fixed_abs, tag = 'smem constant byte address 0x4 - core index']
  #allocation1 [shape = 'u32[144,128]{1,0:T(1,128)}', space=vmem, size = 0x12000, scoped, tag = 'internal scratch']
  #allocation2 [shape = 's32[1]{0}', space=sflag, size = 0x4, scoped, tag = 'scoped memory for tpu_custom_call.1']
  #allocation3 [shape = 's32[1]{0:T(128)S(6)}', space=smem, size = 0x200, scoped, tag = 'prefetched SMEM operand 0']
  #allocation4 [shape = 'u8[512]{0}', space=smem, size = 0x200, scoped, tag = 'prefetched SMEM operand 1']
  %s0 = inlined_call_operand.<no memory space> [shape: s32[1], index: 0, kind: input, shape index: {}]
  %s1 = inlined_call_operand.vmem [shape: s32[2], index: 1, kind: input, shape index: {}]
  %s2 = inlined_call_operand.hbm [shape: u8[4,32,32], index: 2, kind: input, shape index: {}]
  %s3 = inlined_call_operand.vmem [shape: bf16[1,8,32], index: 3, kind: input, shape index: {}]
  %s4 = inlined_call_operand.hbm [shape: bf16[2,32,128], index: 4, kind: input, shape index: {}]
  %s5 = inlined_call_operand.hbm [shape: f32[2,3,8,128], index: 5, kind: output, shape index: {}]
  %s6 = sld [smem:[#allocation0]]
  $region57: #{tpu_custom_call.1} parent=0
    _
  %s8 = ssub.s32 1, %s6
  %s9 = scalar_select 0, %s8, %s6
  %10 = sst [smem:[#allocation3]] %s0
  %s11 = sshll.u32 %s1, 4
  %s12 = int_to_ptr.vmem [resolvable:$true] %s11
  %14 = dma.vmem_to_smem %s12, 16, [#allocation4], [#allocation2]
  %15 = dma.done [#allocation2], 16
  %16 = sfence
  $region1: #{tpu_custom_call.1} parent=0
    #allocation5 [shape = 'u8[32768]{0}', space=vmem, size = 0x8000, scoped, tag = 'input window, operand 2']
    #allocation6 [shape = 's32[2]{0}', space=sflag, size = 0x8, scoped, tag = 'scoped memory for tpu_custom_call.1']
    #allocation7 [shape = 's32[2]{0}', space=sflag, size = 0x8, scoped, tag = 'scoped memory for tpu_custom_call.1']
    #allocation8 [shape = 'u8[16384]{0}', space=vmem, size = 0x4000, scoped, tag = 'input window, operand 4, single buffered']
    #allocation9 [shape = 's32[1]{0}', space=sflag, size = 0x4, scoped, tag = 'scoped memory for tpu_custom_call.1']
    #allocation10 [shape = 'u8[24576]{0}', space=vmem, size = 0x6000, scoped, tag = 'output window, operand 0']
    %17 = vsyncpa [#allocation6], 0
    %s18 = scalar_lea.sflag [#allocation6], 1
    %19 = vsyncpa %s18, 0
    %20 = vsyncpa [#allocation9], 0
    %21 = vsyncpa [#allocation7], 0
    %s22 = scalar_lea.sflag [#allocation7], 1
    %23 = vsyncpa %s22, 0
    loop: start=0, step=1, limit=4
    $region2: #{tpu_custom_call.1} parent=1 // loop_pre_header
      _
    $region3: #{tpu_custom_call.1} parent=1 // loop_header
      %s25 = sphi 0, %s29
      %p26 = scmp.ge.s32.totalorder %s25, 4
      %s32 = sphi 0, %s51
      %s33 = sphi 0, %s47
      %s34 = sphi 0, %s43
      %s35 = sphi 0, %s32
      %s36 = sphi 0, %s33
      %s37 = sphi 0, %s34
      %s38 = sphi 0, %s35
      %s39 = sphi 0, %s36
      %s40 = sphi 0, %s37
      %s62 = sphi 0, %s64
      %s65 = sphi 0, %s62
      %s66 = sphi 0, %s65
      %s82 = sphi 0, %s66
      %s86 = sphi 0, %s86
      %s88 = sphi 0, %s86
      %s89 = sphi 0, %s88
      %s103 = sphi 0, %s89
      %s107 = sphi 0, %s107
      %s109 = sphi 0, %s107
      %s110 = sphi 0, %s109
      %s124 = sphi 0, %s110
      %s130 = sphi 0, %s132
      %s133 = sphi 0, %s130
      %s134 = sphi 0, %s133
      %s150 = sphi 0, %s134
    $region4: #{tpu_custom_call.1} parent=1 // loop_header_branch
      %28 = sbr.rel (%p26) target = $region8
    $region5: #{tpu_custom_call.1} parent=1 // loop_body
      %s30 = ssub.s32 %s25, 1
      %s31 = ssub.s32 %s25, 2
      %s41 = sadd.s32 1, %s34
      %p42 = scmp.ge.s32.totalorder %s41, 1
      %s43 = scalar_select %p42, 0, %s41
      %s44 = sadd.s32 1, %s33
      %s45 = scalar_select %p42, %s44, %s33
      %p46 = scmp.ge.s32.totalorder %s45, 1
      %s47 = scalar_select %p46, 0, %s45
      %s48 = sadd.s32 1, %s32
      %s49 = scalar_select %p46, %s48, %s32
      %p50 = scmp.ge.s32.totalorder %s49, 2
      %s51 = scalar_select %p50, 0, %s49
      %s52 = sadd.s32 %s32, %s34
      %p53 = scmp.lt.s32.totalorder %s52, 0
      %s54 = scalar_select %p53, %s52, 0
      %s55 = sadd.s32 %s51, %s43
      %p56 = scmp.lt.s32.totalorder %s55, 0
      %s57 = scalar_select %p56, %s55, 0
      %s58 = ssub.s32 %s33, %s47
      %s59 = ssub.s32 %s54, %s57
      %s60 = sor.u32 %s58, %s59
      %p61 = scmp.eq.s32.totalorder %s60, 0
      %s63 = sadd.s32 %s62, 1
      %s64 = scalar_select %p61, %s62, %s63
      %p67 = pneg %p61
      %p68 = scmp.eq.s32.totalorder %s25, 1
      %p69 = por %p67, %p68
      %p70 = scmp.ne.s32.totalorder %s62, %s65
      %p71 = scmp.eq.s32.totalorder %s25, 0
      %p72 = por %p70, %p71
      %p73 = scmp.ne.s32.totalorder %s62, %s65
      %p74 = scmp.eq.s32.totalorder %s30, 1
      %p75 = por %p73, %p74
      %p76 = scmp.ne.s32.totalorder %s65, %s66
      %p77 = scmp.eq.s32.totalorder %s30, 0
      %p78 = por %p76, %p77
      %p79 = scmp.ne.s32.totalorder %s65, %s66
      %p80 = scmp.eq.s32.totalorder %s31, 1
      %p81 = por %p79, %p80
      %p83 = scmp.ne.s32.totalorder %s66, %s82
      %p84 = scmp.eq.s32.totalorder %s31, 0
      %p85 = por %p83, %p84
      %s87 = sadd.s32 %s86, 1
      %p90 = scmp.eq.s32.totalorder %s25, 1
      %p91 = scmp.ne.s32.totalorder %s86, %s88
      %p92 = scmp.eq.s32.totalorder %s25, 0
      %p93 = por %p91, %p92
      %p94 = scmp.ne.s32.totalorder %s86, %s88
      %p95 = scmp.eq.s32.totalorder %s30, 1
      %p96 = por %p94, %p95
      %p97 = scmp.ne.s32.totalorder %s88, %s89
      %p98 = scmp.eq.s32.totalorder %s30, 0
      %p99 = por %p97, %p98
      %p100 = scmp.ne.s32.totalorder %s88, %s89
      %p101 = scmp.eq.s32.totalorder %s31, 1
      %p102 = por %p100, %p101
      %p104 = scmp.ne.s32.totalorder %s89, %s103
      %p105 = scmp.eq.s32.totalorder %s31, 0
      %p106 = por %p104, %p105
      %s108 = sadd.s32 %s107, 1
      %p111 = scmp.eq.s32.totalorder %s25, 1
      %p112 = scmp.ne.s32.totalorder %s107, %s109
      %p113 = scmp.eq.s32.totalorder %s25, 0
      %p114 = por %p112, %p113
      %p115 = scmp.ne.s32.totalorder %s107, %s109
      %p116 = scmp.eq.s32.totalorder %s30, 1
      %p117 = por %p115, %p116
      %p118 = scmp.ne.s32.totalorder %s109, %s110
      %p119 = scmp.eq.s32.totalorder %s30, 0
      %p120 = por %p118, %p119
      %p121 = scmp.ne.s32.totalorder %s109, %s110
      %p122 = scmp.eq.s32.totalorder %s31, 1
      %p123 = por %p121, %p122
      %p125 = scmp.ne.s32.totalorder %s110, %s124
      %p126 = scmp.eq.s32.totalorder %s31, 0
      %p127 = por %p125, %p126
      %s128 = ssub.s32 %s32, %s51
      %p129 = scmp.eq.s32.totalorder %s128, 0
      %s131 = sadd.s32 %s130, 1
      %s132 = scalar_select %p129, %s130, %s131
      %p135 = pneg %p129
      %p136 = scmp.eq.s32.totalorder %s25, 1
      %p137 = por %p135, %p136
      %p138 = scmp.ne.s32.totalorder %s130, %s133
      %p139 = scmp.eq.s32.totalorder %s25, 0
      %p140 = por %p138, %p139
      %p141 = scmp.ne.s32.totalorder %s130, %s133
      %p142 = scmp.eq.s32.totalorder %s30, 1
      %p143 = por %p141, %p142
      %p144 = scmp.ne.s32.totalorder %s133, %s134
      %p145 = scmp.eq.s32.totalorder %s30, 0
      %p146 = por %p144, %p145
      %p147 = scmp.ne.s32.totalorder %s133, %s134
      %p148 = scmp.eq.s32.totalorder %s31, 1
      %p149 = por %p147, %p148
      %p151 = scmp.ne.s32.totalorder %s134, %s150
      %p152 = scmp.eq.s32.totalorder %s31, 0
      %p153 = por %p151, %p152
      %p154 = scmp.le.s32.totalorder 1, %s25
      %p155 = scmp.lt.s32.totalorder %s25, 3
      %p156 = pnand %p154, %p155
      %p157 = pneg %p156
      // Predicated region
      $region9: #{tpu_custom_call.1} parent=5 // pred_check
        _
      $region10: #{tpu_custom_call.1} parent=5 // pred_check_branch
        %159 = sbr.rel (%p156) target = $region12
      $region11: #{tpu_custom_call.1} parent=5 // pred_region
        %s160 = ssub.s32 %s25, 1
        // Predicated region
        $region13: #{tpu_custom_call.1} parent=11 // pred_check
          %p161 = pneg %p99
        $region14: #{tpu_custom_call.1} parent=11 // pred_check_branch
          %163 = sbr.rel (%p161) target = $region16
        $region15: #{tpu_custom_call.1} parent=11 // pred_region
          _
        $region16: #{tpu_custom_call.1} parent=11 // pred_fallthru
          _
        // Predicated region
        $region17: #{tpu_custom_call.1} parent=11 // pred_check
          %p164 = pneg %p120
        $region18: #{tpu_custom_call.1} parent=11 // pred_check_branch
          %166 = sbr.rel (%p164) target = $region20
        $region19: #{tpu_custom_call.1} parent=11 // pred_region
          %s168 = ssub.s32 512, 512
          %169 = vsyncadd [#allocation9], %s168
          %s170 = sshll.u32 [#allocation8], 4
          %s171 = int_to_ptr.vmem [resolvable:$true] %s170
          %176 = dma.hbm_to_vmem [thread:$0]  %s4, 512, %s171, [#allocation9], 64, 64, 4
        $region20: #{tpu_custom_call.1} parent=11 // pred_fallthru
          _
      $region12: #{tpu_custom_call.1} parent=5 // pred_fallthru
        _
      %p177 = scmp.lt.s32.totalorder %s25, 2
      // Predicated region
      $region21: #{tpu_custom_call.1} parent=5 // pred_check
        %p178 = pneg %p177
      $region22: #{tpu_custom_call.1} parent=5 // pred_check_branch
        %180 = sbr.rel (%p178) target = $region24
      $region23: #{tpu_custom_call.1} parent=5 // pred_region
        // Predicated region
        $region25: #{tpu_custom_call.1} parent=23 // pred_check
          %p181 = pneg %p72
        $region26: #{tpu_custom_call.1} parent=23 // pred_check_branch
          %183 = sbr.rel (%p181) target = $region28
        $region27: #{tpu_custom_call.1} parent=23 // pred_region
          %s184 = sand.u32 %s62, 1
          %s185 = scalar_lea.sflag [#allocation6], %s184
          %s186 = sand.u32 %s62, 1
          %s187 = smul.addr %s186, 32
          %s188 = scalar_lea.vmem [#allocation5], %s187
          %s189 = sadd.s32 %s32, %s34
          %p190 = scmp.lt.s32.totalorder %s189, 0
          %s191 = scalar_select %p190, %s189, 0
          %s193 = ssub.s32 512, 512
          %194 = vsyncadd %s185, %s193
          %s195 = sadd.s32 %s191, %s33
          %s196 = smul.addr %s195, 128
          %s197 = scalar_lea.hbm %s2, %s196
          %s198 = sshll.u32 %s188, 4
          %s199 = int_to_ptr.vmem [resolvable:$true] %s198
          %204 = dma.hbm_to_vmem [thread:$0]  %s197, 512, %s199, %s185, 128, 128, 8
        $region28: #{tpu_custom_call.1} parent=23 // pred_fallthru
          _
      $region24: #{tpu_custom_call.1} parent=5 // pred_fallthru
        _
      %p205 = scmp.le.s32.totalorder 1, %s25
      %p206 = scmp.lt.s32.totalorder %s25, 3
      %p207 = pnand %p205, %p206
      %p208 = pneg %p207
      // Predicated region
      $region29: #{tpu_custom_call.1} parent=5 // pred_check
        _
      $region30: #{tpu_custom_call.1} parent=5 // pred_check_branch
        %210 = sbr.rel (%p207) target = $region32
      $region31: #{tpu_custom_call.1} parent=5 // pred_region
        %s211 = ssub.s32 %s25, 1
        %s212 = sand.u32 %s65, 1
        %s213 = scalar_lea.sflag [#allocation6], %s212
        %s214 = sand.u32 %s65, 1
        %s215 = smul.addr %s214, 32
        %s216 = scalar_lea.vmem [#allocation5], %s215
        // Predicated region
        $region33: #{tpu_custom_call.1} parent=31 // pred_check
          %p217 = pneg %p78
        $region34: #{tpu_custom_call.1} parent=31 // pred_check_branch
          %219 = sbr.rel (%p217) target = $region36
        $region35: #{tpu_custom_call.1} parent=31 // pred_region
          %220 = dma.done %s213, 512
        $region36: #{tpu_custom_call.1} parent=31 // pred_fallthru
          _
        // Predicated region
        $region37: #{tpu_custom_call.1} parent=31 // pred_check
          %p221 = pneg %p120
        $region38: #{tpu_custom_call.1} parent=31 // pred_check_branch
          %223 = sbr.rel (%p221) target = $region40
        $region39: #{tpu_custom_call.1} parent=31 // pred_region
          %224 = dma.done [#allocation9], 512
        $region40: #{tpu_custom_call.1} parent=31 // pred_fallthru
          _
        %s225 = sand.u32 %s65, 1
        %s226 = scalar_lea.sflag [#allocation6], %s225
        %s227 = sand.u32 %s65, 1
        %s228 = smul.addr %s227, 32
        %s229 = scalar_lea.vmem [#allocation5], %s228
        %p230 = pneg %p78
        %p231 = pneg %p75
        %p232 = pneg %p99
        %p233 = pneg %p96
        %p234 = pneg %p120
        %p235 = pneg %p117
        %p236 = pneg %p146
        %p237 = pneg %p143
        %s238 = sand.u32 %s133, 1
        %s239 = scalar_lea.sflag [#allocation7], %s238
        %s240 = sand.u32 %s133, 1
        %s241 = smul.addr %s240, 24
        %s242 = scalar_lea.vmem [#allocation10], %s241
        %s243 = sadd.s32 %s35, %s37
        %p244 = scmp.lt.s32.totalorder %s243, 0
        %s245 = scalar_select %p244, %s243, 0
        %s247 = sadd.s32 %s35, %s37
        %p248 = scmp.eq.s32.totalorder %s36, 0
        %p249 = scmp.eq.s32.totalorder %s37, 0
        %p250 = pnand %p248, %p249
        %p251 = pneg %p250
        // Predicated region
        $region41: #{tpu_custom_call.1} parent=31 // pred_check
          _
        $region42: #{tpu_custom_call.1} parent=31 // pred_check_branch
          %253 = sbr.rel (%p250) target = $region44
        $region43: #{tpu_custom_call.1} parent=31 // pred_region
          %254 = vst [vmem:[%s242] sm:$0xff] 0.0
          %255 = vst [vmem:[%s242 + $0x8] sm:$0xff] 0.0
          %256 = vst [vmem:[%s242 + $0x10] sm:$0xff] 0.0
        $region44: #{tpu_custom_call.1} parent=31 // pred_fallthru
          _
        %s257 = sld [smem:[#allocation3 + %s36]]
        %s258 = sld [smem:[#allocation4 + %s247]]
        %s259 = smul.addr %s36, 4
        %s260 = scalar_lea.vmem %s3, %s259
        %v261 = vld [vmem:[%s260] sm:$0xf]
        %s262 = smul.u32 %s247, 4
        %s263 = smul.addr %s262, 4
        %s264 = scalar_lea.vmem [#allocation8], %s263
        %v265 = vld [vmem:[%s264] sm:$0xf]
        %v266 = vld [vmem:[%s264 + $0x4] sm:$0xf]
        %v267 = vld [vmem:[%s264 + $0x8] sm:$0xf]
        %v268 = vld [vmem:[%s264 + $0xc] sm:$0xf]
        %s269 = scalar_lea.vmem %s216, 24 [#allocation5]
        %v270 = vld [vmem:[%s269] sm:$0xff]
        %v271 = vunpack.c.0.s8 %v270
        %v272 = vunpack.c.1.s8 %v270
        %v273 = vunpack.c.2.s8 %v270
        %v274 = vunpack.c.3.s8 %v270
        %v275 = vand.u32 %v271, 255
        %v276 = vand.u32 %v272, 255
        %v277 = vand.u32 %v273, 255
        %v278 = vand.u32 %v274, 255
        %v279 = vcvt.s32.f32 %v275
        %v280 = vcvt.s32.f32 %v276
        %v281 = vcvt.s32.f32 %v277
        %v282 = vcvt.s32.f32 %v278
        %v283 = vmul.f32 %v279, 0.003921569
        %v284 = vmul.f32 %v280, 0.003921569
        %v285 = vmul.f32 %v281, 0.003921569
        %v286 = vmul.f32 %v282, 0.003921569
        %v287 = vld [vmem:[%s216] sm:$0xff]
        %v288 = vunpack.c.0.s8 %v287
        %v289 = vunpack.c.1.s8 %v287
        %v290 = vunpack.c.2.s8 %v287
        %v291 = vunpack.c.3.s8 %v287
        %v292 = vand.u32 %v288, 255
        %v293 = vand.u32 %v289, 255
        %v294 = vand.u32 %v290, 255
        %v295 = vand.u32 %v291, 255
        %v296 = vcvt.s32.f32 %v292
        %v297 = vcvt.s32.f32 %v293
        %v298 = vcvt.s32.f32 %v294
        %v299 = vcvt.s32.f32 %v295
        %v300 = vsub.f32 %v296, 255.0
        %v301 = vsub.f32 %v297, 255.0
        %v302 = vsub.f32 %v298, 255.0
        %v303 = vsub.f32 %v299, 255.0
        %v304 = vmul.f32 %v300, %v283
        %v305 = vmul.f32 %v301, %v284
        %v306 = vmul.f32 %v302, %v285
        %v307 = vmul.f32 %v303, %v286
        %v308 = vadd.f32 %v304, 255.0
        %v309 = vadd.f32 %v305, 255.0
        %v310 = vadd.f32 %v306, 255.0
        %v311 = vadd.f32 %v307, 255.0
        %v312 = vpack.c.bf16 %v309, %v308
        %v313 = vpack.c.bf16 %v311, %v310
        %vm314 = vcmask 261120
        %v316 = vsel %vm314, %v261, 0
        %318 = vmatprep.subr.bf16.mxu0 0
        %319 = vmatpush1.bf16.msra.mxu0 %v312
        %320 = vmatprep.subr.bf16.mxu0 0
        %321 = vmatpush1.bf16.msra.mxu0 %v313
        %322 = vmatprep.subr.bf16.mxu0 0
        %323 = vmatpush1.bf16.msra.mxu0 0
        %324 = vmatprep.subr.bf16.mxu0 0
        %325 = vmatpush1.bf16.msra.mxu0 0
        %326 = vmatprep.subr.bf16.mxu0 0
        %327 = vmatpush1.bf16.msra.mxu0 0
        %328 = vmatprep.subr.bf16.mxu0 0
        %329 = vmatpush1.bf16.msra.mxu0 0
        %330 = vmatprep.subr.bf16.mxu0 0
        %331 = vmatpush1.bf16.msra.mxu0 0
        %332 = vmatprep.subr.bf16.mxu0 0
        %333 = vmatpush1.bf16.msra.mxu0 0
        %334 = vmatprep.subr.bf16.mxu0 0
        %335 = vmatpush1.bf16.msra.mxu0 0
        %336 = vmatprep.subr.bf16.mxu0 0
        %337 = vmatpush1.bf16.msra.mxu0 0
        %338 = vmatprep.subr.bf16.mxu0 0
        %339 = vmatpush1.bf16.msra.mxu0 0
        %340 = vmatprep.subr.bf16.mxu0 0
        %341 = vmatpush1.bf16.msra.mxu0 0
        %342 = vmatprep.subr.bf16.mxu0 0
        %343 = vmatpush1.bf16.msra.mxu0 0
        %344 = vmatprep.subr.bf16.mxu0 0
        %345 = vmatpush1.bf16.msra.mxu0 0
        %346 = vmatprep.subr.bf16.mxu0 0
        %347 = vmatpush1.bf16.msra.mxu0 0
        %348 = vmatprep.subr.bf16.mxu0 0
        %349 = vmatpush1.bf16.msra.mxu0 0
        %350 = vmatprep.mubr.bf16.mxu0 0
        %351 = vmatmul.mubr.bf16.gmra.mrb[0].mxu0 %v316
        %v352 = vpop.f32.mrb[0].mxu0
        %v353 = vadd.f32 0.0, %v352
        %v354 = vpop.f32.mrb[0].mxu0
        %v355 = vpop.f32.mrb[0].mxu0
        %v356 = vpop.f32.mrb[0].mxu0
        %357 = vdwg.mxu0
        %v358 = vpack.c.bf16 %v353, %v353
        %v363 = vunpack.c.l.b16 %v265
        %v364 = vunpack.c.l.b16 %v266
        %v365 = vunpack.c.l.b16 %v267
        %v366 = vunpack.c.l.b16 %v268
        %v367 = vpack.c.b16 %v364, %v363
        %v368 = vpack.c.b16 %v366, %v365
        %v372 = vsel %vm314, %v358, 0
        %374 = vmatprep.subr.bf16.mxu0 0
        %375 = vmatpush1.bf16.msra.mxu0 %v367
        %376 = vmatprep.subr.bf16.mxu0 0
        %377 = vmatpush1.bf16.msra.mxu0 %v368
        %378 = vmatprep.subr.bf16.mxu0 0
        %379 = vmatpush1.bf16.msra.mxu0 0
        %380 = vmatprep.subr.bf16.mxu0 0
        %381 = vmatpush1.bf16.msra.mxu0 0
        %382 = vmatprep.subr.bf16.mxu0 0
        %383 = vmatpush1.bf16.msra.mxu0 0
        %384 = vmatprep.subr.bf16.mxu0 0
        %385 = vmatpush1.bf16.msra.mxu0 0
        %386 = vmatprep.subr.bf16.mxu0 0
        %387 = vmatpush1.bf16.msra.mxu0 0
        %388 = vmatprep.subr.bf16.mxu0 0
        %389 = vmatpush1.bf16.msra.mxu0 0
        %390 = vmatprep.subr.bf16.mxu0 0
        %391 = vmatpush1.bf16.msra.mxu0 0
        %392 = vmatprep.subr.bf16.mxu0 0
        %393 = vmatpush1.bf16.msra.mxu0 0
        %394 = vmatprep.subr.bf16.mxu0 0
        %395 = vmatpush1.bf16.msra.mxu0 0
        %396 = vmatprep.subr.bf16.mxu0 0
        %397 = vmatpush1.bf16.msra.mxu0 0
        %398 = vmatprep.subr.bf16.mxu0 0
        %399 = vmatpush1.bf16.msra.mxu0 0
        %400 = vmatprep.subr.bf16.mxu0 0
        %401 = vmatpush1.bf16.msra.mxu0 0
        %402 = vmatprep.subr.bf16.mxu0 0
        %403 = vmatpush1.bf16.msra.mxu0 0
        %404 = vmatprep.subr.bf16.mxu0 0
        %405 = vmatpush1.bf16.msra.mxu0 0
        %406 = vmatprep.mubr.bf16.mxu0 0
        %407 = vmatmul.mubr.bf16.gmra.mrb[0].mxu0 %v372
        %v408 = vpop.f32.mrb[0].mxu0
        %v409 = vadd.f32 0.0, %v408
        %v410 = vpop.f32.mrb[0].mxu0
        %v411 = vpop.f32.mrb[0].mxu0
        %v412 = vpop.f32.mrb[0].mxu0
        %413 = vdwg.mxu0
        %s414 = sshra.s32 %s258, 7
        %s415 = sand.u32 %s258, 127
        %s416 = sadd.s32 %s414, %s257
        %s417 = scalar_lea.vmem %s242, %s416 [#allocation10]
        %v418 = vld [vmem:[%s417] sm:$0xff]
        %v419 = vadd.f32 %v418, %v409
        %420 = vst [vmem:[%s417] sm:$0xff] %v419
        %s421 = scalar_lea.vmem %s216, 8 [#allocation5]
        %v422 = vld [vmem:[%s421] sm:$0xff]
        %v423 = vunpack.c.0.s8 %v422
        %v424 = vunpack.c.1.s8 %v422
        %v425 = vunpack.c.2.s8 %v422
        %v426 = vunpack.c.3.s8 %v422
        %v427 = vand.u32 %v423, 255
        %v428 = vand.u32 %v424, 255
        %v429 = vand.u32 %v425, 255
        %v430 = vand.u32 %v426, 255
        %v431 = vcvt.s32.f32 %v427
        %v432 = vcvt.s32.f32 %v428
        %v433 = vcvt.s32.f32 %v429
        %v434 = vcvt.s32.f32 %v430
        %v435 = vsub.f32 %v431, 255.0
        %v436 = vsub.f32 %v432, 255.0
        %v437 = vsub.f32 %v433, 255.0
        %v438 = vsub.f32 %v434, 255.0
        %v439 = vmul.f32 %v435, %v283
        %v440 = vmul.f32 %v436, %v284
        %v441 = vmul.f32 %v437, %v285
        %v442 = vmul.f32 %v438, %v286
        %v443 = vadd.f32 %v439, 255.0
        %v444 = vadd.f32 %v440, 255.0
        %v445 = vadd.f32 %v441, 255.0
        %v446 = vadd.f32 %v442, 255.0
        %v447 = vpack.c.bf16 %v444, %v443
        %v448 = vpack.c.bf16 %v446, %v445
        %449 = vmatprep.subr.bf16.mxu0 0
        %450 = vmatpush1.bf16.msra.mxu0 %v447
        %451 = vmatprep.subr.bf16.mxu0 0
        %452 = vmatpush1.bf16.msra.mxu0 %v448
        %453 = vmatprep.subr.bf16.mxu0 0
        %454 = vmatpush1.bf16.msra.mxu0 0
        %455 = vmatprep.subr.bf16.mxu0 0
        %456 = vmatpush1.bf16.msra.mxu0 0
        %457 = vmatprep.subr.bf16.mxu0 0
        %458 = vmatpush1.bf16.msra.mxu0 0
        %459 = vmatprep.subr.bf16.mxu0 0
        %460 = vmatpush1.bf16.msra.mxu0 0
        %461 = vmatprep.subr.bf16.mxu0 0
        %462 = vmatpush1.bf16.msra.mxu0 0
        %463 = vmatprep.subr.bf16.mxu0 0
        %464 = vmatpush1.bf16.msra.mxu0 0
        %465 = vmatprep.subr.bf16.mxu0 0
        %466 = vmatpush1.bf16.msra.mxu0 0
        %467 = vmatprep.subr.bf16.mxu0 0
        %468 = vmatpush1.bf16.msra.mxu0 0
        %469 = vmatprep.subr.bf16.mxu0 0
        %470 = vmatpush1.bf16.msra.mxu0 0
        %471 = vmatprep.subr.bf16.mxu0 0
        %472 = vmatpush1.bf16.msra.mxu0 0
        %473 = vmatprep.subr.bf16.mxu0 0
        %474 = vmatpush1.bf16.msra.mxu0 0
        %475 = vmatprep.subr.bf16.mxu0 0
        %476 = vmatpush1.bf16.msra.mxu0 0
        %477 = vmatprep.subr.bf16.mxu0 0
        %478 = vmatpush1.bf16.msra.mxu0 0
        %479 = vmatprep.subr.bf16.mxu0 0
        %480 = vmatpush1.bf16.msra.mxu0 0
        %481 = vmatprep.mubr.bf16.mxu0 0
        %482 = vmatmul.mubr.bf16.gmra.mrb[0].mxu0 %v316
        %v483 = vpop.f32.mrb[0].mxu0
        %v484 = vadd.f32 0.0, %v483
        %v485 = vpop.f32.mrb[0].mxu0
        %v486 = vpop.f32.mrb[0].mxu0
        %v487 = vpop.f32.mrb[0].mxu0
        %488 = vdwg.mxu0
        %v489 = vpack.c.bf16 %v484, %v484
        %v491 = vsel %vm314, %v489, 0
        %493 = vmatprep.subr.bf16.mxu0 0
        %494 = vmatpush1.bf16.msra.mxu0 %v367
        %495 = vmatprep.subr.bf16.mxu0 0
        %496 = vmatpush1.bf16.msra.mxu0 %v368
        %497 = vmatprep.subr.bf16.mxu0 0
        %498 = vmatpush1.bf16.msra.mxu0 0
        %499 = vmatprep.subr.bf16.mxu0 0
        %500 = vmatpush1.bf16.msra.mxu0 0
        %501 = vmatprep.subr.bf16.mxu0 0
        %502 = vmatpush1.bf16.msra.mxu0 0
        %503 = vmatprep.subr.bf16.mxu0 0
        %504 = vmatpush1.bf16.msra.mxu0 0
        %505 = vmatprep.subr.bf16.mxu0 0
        %506 = vmatpush1.bf16.msra.mxu0 0
        %507 = vmatprep.subr.bf16.mxu0 0
        %508 = vmatpush1.bf16.msra.mxu0 0
        %509 = vmatprep.subr.bf16.mxu0 0
        %510 = vmatpush1.bf16.msra.mxu0 0
        %511 = vmatprep.subr.bf16.mxu0 0
        %512 = vmatpush1.bf16.msra.mxu0 0
        %513 = vmatprep.subr.bf16.mxu0 0
        %514 = vmatpush1.bf16.msra.mxu0 0
        %515 = vmatprep.subr.bf16.mxu0 0
        %516 = vmatpush1.bf16.msra.mxu0 0
        %517 = vmatprep.subr.bf16.mxu0 0
        %518 = vmatpush1.bf16.msra.mxu0 0
        %519 = vmatprep.subr.bf16.mxu0 0
        %520 = vmatpush1.bf16.msra.mxu0 0
        %521 = vmatprep.subr.bf16.mxu0 0
        %522 = vmatpush1.bf16.msra.mxu0 0
        %523 = vmatprep.subr.bf16.mxu0 0
        %524 = vmatpush1.bf16.msra.mxu0 0
        %525 = vmatprep.mubr.bf16.mxu0 0
        %526 = vmatmul.mubr.bf16.gmra.mrb[0].mxu0 %v491
        %v527 = vpop.f32.mrb[0].mxu0
        %v528 = vadd.f32 0.0, %v527
        %v529 = vpop.f32.mrb[0].mxu0
        %v530 = vpop.f32.mrb[0].mxu0
        %v531 = vpop.f32.mrb[0].mxu0
        %532 = vdwg.mxu0
        %s533 = sadd.s32 %s416, 8
        %s534 = scalar_lea.vmem %s242, %s533 [#allocation10]
        %v535 = vld [vmem:[%s534] sm:$0xff]
        %v536 = vadd.f32 %v535, %v528
        %537 = vst [vmem:[%s534] sm:$0xff] %v536
        %s538 = scalar_lea.vmem %s216, 16 [#allocation5]
        %v539 = vld [vmem:[%s538] sm:$0xff]
        %v540 = vunpack.c.0.s8 %v539
        %v541 = vunpack.c.1.s8 %v539
        %v542 = vunpack.c.2.s8 %v539
        %v543 = vunpack.c.3.s8 %v539
        %v544 = vand.u32 %v540, 255
        %v545 = vand.u32 %v541, 255
        %v546 = vand.u32 %v542, 255
        %v547 = vand.u32 %v543, 255
        %v548 = vcvt.s32.f32 %v544
        %v549 = vcvt.s32.f32 %v545
        %v550 = vcvt.s32.f32 %v546
        %v551 = vcvt.s32.f32 %v547
        %v552 = vsub.f32 %v548, 255.0
        %v553 = vsub.f32 %v549, 255.0
        %v554 = vsub.f32 %v550, 255.0
        %v555 = vsub.f32 %v551, 255.0
        %v556 = vmul.f32 %v552, %v283
        %v557 = vmul.f32 %v553, %v284
        %v558 = vmul.f32 %v554, %v285
        %v559 = vmul.f32 %v555, %v286
        %v560 = vadd.f32 %v556, 255.0
        %v561 = vadd.f32 %v557, 255.0
        %v562 = vadd.f32 %v558, 255.0
        %v563 = vadd.f32 %v559, 255.0
        %v564 = vpack.c.bf16 %v561, %v560
        %v565 = vpack.c.bf16 %v563, %v562
        %566 = vmatprep.subr.bf16.mxu0 0
        %567 = vmatpush1.bf16.msra.mxu0 %v564
        %568 = vmatprep.subr.bf16.mxu0 0
        %569 = vmatpush1.bf16.msra.mxu0 %v565
        %570 = vmatprep.subr.bf16.mxu0 0
        %571 = vmatpush1.bf16.msra.mxu0 0
        %572 = vmatprep.subr.bf16.mxu0 0
        %573 = vmatpush1.bf16.msra.mxu0 0
        %574 = vmatprep.subr.bf16.mxu0 0
        %575 = vmatpush1.bf16.msra.mxu0 0
        %576 = vmatprep.subr.bf16.mxu0 0
        %577 = vmatpush1.bf16.msra.mxu0 0
        %578 = vmatprep.subr.bf16.mxu0 0
        %579 = vmatpush1.bf16.msra.mxu0 0
        %580 = vmatprep.subr.bf16.mxu0 0
        %581 = vmatpush1.bf16.msra.mxu0 0
        %582 = vmatprep.subr.bf16.mxu0 0
        %583 = vmatpush1.bf16.msra.mxu0 0
        %584 = vmatprep.subr.bf16.mxu0 0
        %585 = vmatpush1.bf16.msra.mxu0 0
        %586 = vmatprep.subr.bf16.mxu0 0
        %587 = vmatpush1.bf16.msra.mxu0 0
        %588 = vmatprep.subr.bf16.mxu0 0
        %589 = vmatpush1.bf16.msra.mxu0 0
        %590 = vmatprep.subr.bf16.mxu0 0
        %591 = vmatpush1.bf16.msra.mxu0 0
        %592 = vmatprep.subr.bf16.mxu0 0
        %593 = vmatpush1.bf16.msra.mxu0 0
        %594 = vmatprep.subr.bf16.mxu0 0
        %595 = vmatpush1.bf16.msra.mxu0 0
        %596 = vmatprep.subr.bf16.mxu0 0
        %597 = vmatpush1.bf16.msra.mxu0 0
        %598 = vmatprep.mubr.bf16.mxu0 0
        %599 = vmatmul.mubr.bf16.gmra.mrb[0].mxu0 %v316
        %v600 = vpop.f32.mrb[0].mxu0
        %v601 = vadd.f32 0.0, %v600
        %v602 = vpop.f32.mrb[0].mxu0
        %v603 = vpop.f32.mrb[0].mxu0
        %v604 = vpop.f32.mrb[0].mxu0
        %605 = vdwg.mxu0
        %v606 = vpack.c.bf16 %v601, %v601
        %v608 = vsel %vm314, %v606, 0
        %610 = vmatprep.subr.bf16.mxu0 0
        %611 = vmatpush1.bf16.msra.mxu0 %v367
        %612 = vmatprep.subr.bf16.mxu0 0
        %613 = vmatpush1.bf16.msra.mxu0 %v368
        %614 = vmatprep.subr.bf16.mxu0 0
        %615 = vmatpush1.bf16.msra.mxu0 0
        %616 = vmatprep.subr.bf16.mxu0 0
        %617 = vmatpush1.bf16.msra.mxu0 0
        %618 = vmatprep.subr.bf16.mxu0 0
        %619 = vmatpush1.bf16.msra.mxu0 0
        %620 = vmatprep.subr.bf16.mxu0 0
        %621 = vmatpush1.bf16.msra.mxu0 0
        %622 = vmatprep.subr.bf16.mxu0 0
        %623 = vmatpush1.bf16.msra.mxu0 0
        %624 = vmatprep.subr.bf16.mxu0 0
        %625 = vmatpush1.bf16.msra.mxu0 0
        %626 = vmatprep.subr.bf16.mxu0 0
        %627 = vmatpush1.bf16.msra.mxu0 0
        %628 = vmatprep.subr.bf16.mxu0 0
        %629 = vmatpush1.bf16.msra.mxu0 0
        %630 = vmatprep.subr.bf16.mxu0 0
        %631 = vmatpush1.bf16.msra.mxu0 0
        %632 = vmatprep.subr.bf16.mxu0 0
        %633 = vmatpush1.bf16.msra.mxu0 0
        %634 = vmatprep.subr.bf16.mxu0 0
        %635 = vmatpush1.bf16.msra.mxu0 0
        %636 = vmatprep.subr.bf16.mxu0 0
        %637 = vmatpush1.bf16.msra.mxu0 0
        %638 = vmatprep.subr.bf16.mxu0 0
        %639 = vmatpush1.bf16.msra.mxu0 0
        %640 = vmatprep.subr.bf16.mxu0 0
        %641 = vmatpush1.bf16.msra.mxu0 0
        %642 = vmatprep.mubr.bf16.mxu0 0
        %643 = vmatmul.mubr.bf16.gmra.mrb[0].mxu0 %v608
        %v644 = vpop.f32.mrb[0].mxu0
        %v645 = vadd.f32 0.0, %v644
        %v646 = vpop.f32.mrb[0].mxu0
        %v647 = vpop.f32.mrb[0].mxu0
        %v648 = vpop.f32.mrb[0].mxu0
        %649 = vdwg.mxu0
        %s650 = sadd.s32 %s416, 16
        %s651 = scalar_lea.vmem %s242, %s650 [#allocation10]
        %v652 = vld [vmem:[%s651] sm:$0xff]
        %v653 = vadd.f32 %v652, %v645
        %654 = vst [vmem:[%s651] sm:$0xff] %v653
        %s655 = sand.u32 %s133, 1
        %s656 = scalar_lea.sflag [#allocation7], %s655
        %s657 = sand.u32 %s133, 1
        %s658 = smul.addr %s657, 24
        %s659 = scalar_lea.vmem [#allocation10], %s658
        // Predicated region
        $region45: #{tpu_custom_call.1} parent=31 // pred_check
          %p660 = pneg %p143
        $region46: #{tpu_custom_call.1} parent=31 // pred_check_branch
          %662 = sbr.rel (%p660) target = $region48
        $region47: #{tpu_custom_call.1} parent=31 // pred_region
          %s664 = ssub.s32 384, 384
          %665 = vsyncadd %s656, %s664
          %s666 = smul.addr %s35, 3
          %s667 = smul.addr %s666, 128
          %s668 = scalar_lea.hbm %s5, %s667
          %s669 = sshll.u32 %s659, 4
          %s670 = int_to_ptr.vmem [resolvable:$true] %s669
          %675 = dma.vmem_to_hbm [thread:$0]  %s670, 384, %s668, %s656, 128, 128, 8
        $region48: #{tpu_custom_call.1} parent=31 // pred_fallthru
          _
      $region32: #{tpu_custom_call.1} parent=5 // pred_fallthru
        _
      %p676 = scmp.le.s32.totalorder 2, %s25
      // Predicated region
      $region49: #{tpu_custom_call.1} parent=5 // pred_check
        %p677 = pneg %p676
      $region50: #{tpu_custom_call.1} parent=5 // pred_check_branch
        %679 = sbr.rel (%p677) target = $region52
      $region51: #{tpu_custom_call.1} parent=5 // pred_region
        %s680 = ssub.s32 %s25, 2
        // Predicated region
        $region53: #{tpu_custom_call.1} parent=51 // pred_check
          %p681 = pneg %p149
        $region54: #{tpu_custom_call.1} parent=51 // pred_check_branch
          %683 = sbr.rel (%p681) target = $region56
        $region55: #{tpu_custom_call.1} parent=51 // pred_region
          %s684 = sand.u32 %s134, 1
          %s685 = scalar_lea.sflag [#allocation7], %s684
          %s686 = sand.u32 %s134, 1
          %s687 = smul.addr %s686, 24
          %s688 = scalar_lea.vmem [#allocation10], %s687
          %689 = dma.done %s685, 384
        $region56: #{tpu_custom_call.1} parent=51 // pred_fallthru
          _
      $region52: #{tpu_custom_call.1} parent=5 // pred_fallthru
        _
    $region6: #{tpu_custom_call.1} parent=1 // loop_footer
      %s29 = sadd.s32 1, %s25
    $region7: #{tpu_custom_call.1} parent=1 // loop_footer_branch
      %24 = sbr.rel target = $region3
    $region8: #{tpu_custom_call.1} parent=1 // loop_exit
      _
    %690 = vsyncpa [#allocation6], 1
    %s691 = scalar_lea.sflag [#allocation6], 1
    %692 = vsyncpa %s691, 1
    %693 = vsyncpa [#allocation9], 1
    %694 = vsyncpa [#allocation7], 1
    %s695 = scalar_lea.sflag [#allocation7], 1
    %696 = vsyncpa %s695, 1

</llo_original>
